<compile_context>
chip_gen: v7x
topology: tpu7x:2x2x1
jax: 0.10.0
libtpu: 0.0.40
codegen_flags: <defaults>
</compile_context>

<pallas_src>
import jax
import jax.numpy as jnp
from jax.experimental import pallas as pl
from jax.experimental.pallas import tpu as pltpu


def actor_kernel(x_ref, w1_ref, b1_ref, w2_ref, b2_ref, w3_ref, b3_ref, out_ref):
    # ---- Layer 1: Linear(nS, 20) + Tanh  (bf16 MXU operands, f32 accumulate) ----
    h1 = jnp.dot(x_ref[...], w1_ref[...], preferred_element_type=jnp.float32)
    h1 = jnp.tanh(h1 + b1_ref[...])                       # f32 elementwise (v5e-safe)

    # ---- Layer 2: Linear(20, 20) + Tanh ----
    h2 = jnp.dot(h1.astype(w2_ref.dtype), w2_ref[...],
                 preferred_element_type=jnp.float32)
    h2 = jnp.tanh(h2 + b2_ref[...])

    # ---- Layer 3: Linear(20, nA) ----
    logits = jnp.dot(h2.astype(w3_ref.dtype), w3_ref[...],
                     preferred_element_type=jnp.float32)
    logits = logits + b3_ref[...]

    # ---- log_softmax over dim=1 (action dimension), numerically stable, all f32 ----
    m = jnp.max(logits, axis=1, keepdims=True)
    shifted = logits - m
    lse = jnp.log(jnp.sum(jnp.exp(shifted), axis=1, keepdims=True))
    out_ref[...] = (shifted - lse).astype(out_ref.dtype)


def _round_up(n, m):
    return ((n + m - 1) // m) * m


def actor_forward(x, params, *, max_tile_b=512, use_bf16=True):
    """x: (B, nS) float32.  params: dict of (in, out) weights and (1, out) biases."""
    w1, b1, w2, b2, w3, b3 = (params["w1"], params["b1"], params["w2"],
                              params["b2"], params["w3"], params["b3"])
    B, nS = x.shape
    H = w1.shape[1]
    nA = w3.shape[1]

    # MXU operands in bf16 (native fast path on v6e/v7x, halves HBM bytes for x);
    # biases and all elementwise/log_softmax math stay f32.
    mxu_dtype = jnp.bfloat16 if use_bf16 else jnp.float32
    x_c = x.astype(mxu_dtype)
    w1_c = w1.astype(mxu_dtype)
    w2_c = w2.astype(mxu_dtype)
    w3_c = w3.astype(mxu_dtype)

    # Batch tile: as large as possible (<= max_tile_b) to amortize the ~0.35 us
    # per-grid-step overhead; sublane-aligned (multiple of 8). Pad B to a tile multiple.
    tile_b = min(max_tile_b, _round_up(B, 8))
    B_pad = _round_up(B, tile_b)
    if B_pad != B:
        x_c = jnp.pad(x_c, ((0, B_pad - B), (0, 0)))

    grid = (B_pad // tile_b,)

    # Weights / biases: constant (0, 0) index_map -> single DMA, resident in VMEM
    # across every grid step (Pallas skips re-DMA for revisited blocks).
    def pinned(shape):
        return pl.BlockSpec(shape, lambda i: (0, 0))

    out = pl.pallas_call(
        actor_kernel,
        out_shape=jax.ShapeDtypeStruct((B_pad, nA), jnp.float32),
        grid=grid,
        in_specs=[
            pl.BlockSpec((tile_b, nS), lambda i: (i, 0)),   # x: pipelined batch tiles
            pinned((nS, H)),                                # w1
            pinned((1, H)),                                 # b1
            pinned((H, H)),                                 # w2
            pinned((1, H)),                                 # b2
            pinned((H, nA)),                                # w3
            pinned((1, nA)),                                # b3
        ],
        out_specs=pl.BlockSpec((tile_b, nA), lambda i: (i, 0)),
        compiler_params=pltpu.CompilerParams(
            dimension_semantics=("parallel",)),             # shard batch tiles across TCs (v7x)
    )(x_c, w1_c, b1, w2_c, b2, w3_c, b3)

    return out[:B]


def init_params(key, nS, nA, hidden=20):
    """Deterministic init mimicking PyTorch nn.Linear default (uniform +/- 1/sqrt(fan_in)).
    Weights are stored as (in, out) — transposed relative to PyTorch's (out, in)."""
    keys = jax.random.split(key, 6)

    def lin(kw, kb, fan_in, fan_out):
        bound = 1.0 / jnp.sqrt(jnp.float32(fan_in))
        w = jax.random.uniform(kw, (fan_in, fan_out), jnp.float32, -bound, bound)
        b = jax.random.uniform(kb, (1, fan_out), jnp.float32, -bound, bound)
        return w, b

    w1, b1 = lin(keys[0], keys[1], nS, hidden)
    w2, b2 = lin(keys[2], keys[3], hidden, hidden)
    w3, b3 = lin(keys[4], keys[5], hidden, nA)
    return {"w1": w1, "b1": b1, "w2": w2, "b2": b2, "w3": w3, "b3": b3}


def _reference(x, params, mxu_dtype=jnp.bfloat16):
    """Pure-JAX reference matching the kernel's bf16-matmul / f32-epilogue arithmetic."""
    h = jnp.dot(x.astype(mxu_dtype), params["w1"].astype(mxu_dtype),
                preferred_element_type=jnp.float32)
    h = jnp.tanh(h + params["b1"])
    h = jnp.dot(h.astype(mxu_dtype), params["w2"].astype(mxu_dtype),
                preferred_element_type=jnp.float32)
    h = jnp.tanh(h + params["b2"])
    logits = jnp.dot(h.astype(mxu_dtype), params["w3"].astype(mxu_dtype),
                     preferred_element_type=jnp.float32) + params["b3"]
    return jax.nn.log_softmax(logits, axis=1)


if __name__ == "__main__":
    key = jax.random.PRNGKey(0)
    k_params, k_x1, k_x2 = jax.random.split(key, 3)

    nS, nA = 32, 6                      # small shapes consistent with Actor(nS, nA)
    params = init_params(k_params, nS, nA)

    # Case 1: tiny per-env-step batch (single grid step).
    B1 = 8
    x1 = jax.random.normal(k_x1, (B1, nS), dtype=jnp.float32)
    out1 = jax.block_until_ready(actor_forward(x1, params))
    assert out1.shape == (B1, nA)
    row_sums1 = jnp.sum(jnp.exp(out1), axis=1)
    assert bool(jnp.all(jnp.abs(row_sums1 - 1.0) < 1e-4))
    assert bool(jnp.all(jnp.abs(out1 - _reference(x1, params)) < 5e-2))

    # Case 2: larger ragged batch exercising the grid + padding + pipelining path.
    B2 = 1037
    x2 = jax.random.normal(k_x2, (B2, nS), dtype=jnp.float32)
    out2 = jax.block_until_ready(actor_forward(x2, params))
    assert out2.shape == (B2, nA)
    row_sums2 = jnp.sum(jnp.exp(out2), axis=1)
    assert bool(jnp.all(jnp.abs(row_sums2 - 1.0) < 1e-4))
    assert bool(jnp.all(jnp.abs(out2 - _reference(x2, params)) < 5e-2))

    print("KERNEL_OK")
</pallas_src>

<mosaic_0001>
module attributes {stable_mosaic.version = 11 : i64} {
  func.func @actor_kernel(%arg0: i32, %arg1: memref<8x32xbf16, #tpu.memory_space<vmem>>, %arg2: memref<32x20xbf16, #tpu.memory_space<vmem>>, %arg3: memref<1x20xf32, #tpu.memory_space<vmem>>, %arg4: memref<20x20xbf16, #tpu.memory_space<vmem>>, %arg5: memref<1x20xf32, #tpu.memory_space<vmem>>, %arg6: memref<20x6xbf16, #tpu.memory_space<vmem>>, %arg7: memref<1x6xf32, #tpu.memory_space<vmem>>, %arg8: memref<8x6xf32, #tpu.memory_space<vmem>>) attributes {dimension_semantics = [#tpu.dimension_semantics<parallel>], iteration_bounds = array<i64: 1>, scalar_prefetch = 0 : i64, scratch_operands = 0 : i64, tpu.core_type = #tpu.core_type<tc>, window_params = [{transform_indices = @transform_0, window_bounds = array<i64: 8, 32>}, {pipeline_mode = #tpu.pipeline_mode<synchronous>, transform_indices = @transform_1, window_bounds = array<i64: 32, 20>}, {pipeline_mode = #tpu.pipeline_mode<synchronous>, transform_indices = @transform_2, window_bounds = array<i64: 1, 20>}, {pipeline_mode = #tpu.pipeline_mode<synchronous>, transform_indices = @transform_3, window_bounds = array<i64: 20, 20>}, {pipeline_mode = #tpu.pipeline_mode<synchronous>, transform_indices = @transform_4, window_bounds = array<i64: 1, 20>}, {pipeline_mode = #tpu.pipeline_mode<synchronous>, transform_indices = @transform_5, window_bounds = array<i64: 20, 6>}, {pipeline_mode = #tpu.pipeline_mode<synchronous>, transform_indices = @transform_6, window_bounds = array<i64: 1, 6>}, {transform_indices = @transform_7, window_bounds = array<i64: 8, 6>}]} {
    %c0 = arith.constant 0 : index
    %c0_0 = arith.constant 0 : index
    %0 = vector.load %arg1[%c0, %c0_0] : memref<8x32xbf16, #tpu.memory_space<vmem>>, vector<8x32xbf16>
    %c0_1 = arith.constant 0 : index
    %c0_2 = arith.constant 0 : index
    %1 = vector.load %arg2[%c0_1, %c0_2] : memref<32x20xbf16, #tpu.memory_space<vmem>>, vector<32x20xbf16>
    %cst = arith.constant dense<0.000000e+00> : vector<8x20xf32>
    %2 = tpu.matmul %0, %1, %cst {dimension_numbers = #tpu.dot_dimension_numbers<[1], [0], [0], [1], [0, 0, 1, 1], [], []>} : vector<8x32xbf16>, vector<32x20xbf16>, vector<8x20xf32> -> vector<8x20xf32>
    %c0_3 = arith.constant 0 : index
    %c0_4 = arith.constant 0 : index
    %3 = vector.load %arg3[%c0_3, %c0_4] : memref<1x20xf32, #tpu.memory_space<vmem>>, vector<1x20xf32>
    %4 = vector.broadcast %3 : vector<1x20xf32> to vector<8x20xf32>
    %5 = arith.addf %2, %4 : vector<8x20xf32>
    %6 = math.tanh %5 : vector<8x20xf32>
    %7 = arith.truncf %6 : vector<8x20xf32> to vector<8x20xbf16>
    %c0_5 = arith.constant 0 : index
    %c0_6 = arith.constant 0 : index
    %8 = vector.load %arg4[%c0_5, %c0_6] : memref<20x20xbf16, #tpu.memory_space<vmem>>, vector<20x20xbf16>
    %cst_7 = arith.constant dense<0.000000e+00> : vector<8x20xf32>
    %9 = tpu.matmul %7, %8, %cst_7 {dimension_numbers = #tpu.dot_dimension_numbers<[1], [0], [0], [1], [0, 0, 1, 1], [], []>} : vector<8x20xbf16>, vector<20x20xbf16>, vector<8x20xf32> -> vector<8x20xf32>
    %c0_8 = arith.constant 0 : index
    %c0_9 = arith.constant 0 : index
    %10 = vector.load %arg5[%c0_8, %c0_9] : memref<1x20xf32, #tpu.memory_space<vmem>>, vector<1x20xf32>
    %11 = vector.broadcast %10 : vector<1x20xf32> to vector<8x20xf32>
    %12 = arith.addf %9, %11 : vector<8x20xf32>
    %13 = math.tanh %12 : vector<8x20xf32>
    %14 = arith.truncf %13 : vector<8x20xf32> to vector<8x20xbf16>
    %c0_10 = arith.constant 0 : index
    %c0_11 = arith.constant 0 : index
    %15 = vector.load %arg6[%c0_10, %c0_11] : memref<20x6xbf16, #tpu.memory_space<vmem>>, vector<20x6xbf16>
    %cst_12 = arith.constant dense<0.000000e+00> : vector<8x6xf32>
    %16 = tpu.matmul %14, %15, %cst_12 {dimension_numbers = #tpu.dot_dimension_numbers<[1], [0], [0], [1], [0, 0, 1, 1], [], []>} : vector<8x20xbf16>, vector<20x6xbf16>, vector<8x6xf32> -> vector<8x6xf32>
    %c0_13 = arith.constant 0 : index
    %c0_14 = arith.constant 0 : index
    %17 = vector.load %arg7[%c0_13, %c0_14] : memref<1x6xf32, #tpu.memory_space<vmem>>, vector<1x6xf32>
    %18 = vector.broadcast %17 : vector<1x6xf32> to vector<8x6xf32>
    %19 = arith.addf %16, %18 : vector<8x6xf32>
    %cst_15 = arith.constant dense<0xFF800000> : vector<8xf32>
    %20 = vector.multi_reduction <maximumf>, %19, %cst_15 [1] : vector<8x6xf32> to vector<8xf32>
    %21 = vector.shape_cast %20 : vector<8xf32> to vector<8x1xf32>
    %22 = vector.broadcast %21 : vector<8x1xf32> to vector<8x6xf32>
    %23 = arith.subf %19, %22 : vector<8x6xf32>
    %24 = math.exp %23 : vector<8x6xf32>
    %cst_16 = arith.constant dense<0.000000e+00> : vector<8xf32>
    %25 = vector.multi_reduction <add>, %24, %cst_16 [1] : vector<8x6xf32> to vector<8xf32>
    %26 = vector.shape_cast %25 : vector<8xf32> to vector<8x1xf32>
    %27 = math.log %26 : vector<8x1xf32>
    %28 = vector.broadcast %27 : vector<8x1xf32> to vector<8x6xf32>
    %29 = arith.subf %23, %28 : vector<8x6xf32>
    %c0_17 = arith.constant 0 : index
    %c0_18 = arith.constant 0 : index
    %30 = vector.load %arg8[%c0_17, %c0_18] : memref<8x6xf32, #tpu.memory_space<vmem>>, vector<8x6xf32>
    tpu.vector_store %arg8[%c0_17, %c0_18], %29 {strides = array<i32>} : memref<8x6xf32, #tpu.memory_space<vmem>>, vector<8x6xf32>,
    return
  }
  func.func @transform_0(%arg0: i32) -> (i32, i32) {
    %c0_i32 = arith.constant 0 : i32
    %c0_i32_0 = arith.constant 0 : i32
    return %arg0, %c0_i32 : i32, i32
  }
  func.func @transform_1(%arg0: i32) -> (i32, i32) {
    %c0_i32 = arith.constant 0 : i32
    %c0_i32_0 = arith.constant 0 : i32
    %c0_i32_1 = arith.constant 0 : i32
    return %c0_i32, %c0_i32_0 : i32, i32
  }
  func.func @transform_2(%arg0: i32) -> (i32, i32) {
    %c0_i32 = arith.constant 0 : i32
    %c0_i32_0 = arith.constant 0 : i32
    %c0_i32_1 = arith.constant 0 : i32
    return %c0_i32, %c0_i32_0 : i32, i32
  }
  func.func @transform_3(%arg0: i32) -> (i32, i32) {
    %c0_i32 = arith.constant 0 : i32
    %c0_i32_0 = arith.constant 0 : i32
    %c0_i32_1 = arith.constant 0 : i32
    return %c0_i32, %c0_i32_0 : i32, i32
  }
  func.func @transform_4(%arg0: i32) -> (i32, i32) {
    %c0_i32 = arith.constant 0 : i32
    %c0_i32_0 = arith.constant 0 : i32
    %c0_i32_1 = arith.constant 0 : i32
    return %c0_i32, %c0_i32_0 : i32, i32
  }
  func.func @transform_5(%arg0: i32) -> (i32, i32) {
    %c0_i32 = arith.constant 0 : i32
    %c0_i32_0 = arith.constant 0 : i32
    %c0_i32_1 = arith.constant 0 : i32
    return %c0_i32, %c0_i32_0 : i32, i32
  }
  func.func @transform_6(%arg0: i32) -> (i32, i32) {
    %c0_i32 = arith.constant 0 : i32
    %c0_i32_0 = arith.constant 0 : i32
    %c0_i32_1 = arith.constant 0 : i32
    return %c0_i32, %c0_i32_0 : i32, i32
  }
  func.func @transform_7(%arg0: i32) -> (i32, i32) {
    %c0_i32 = arith.constant 0 : i32
    %c0_i32_0 = arith.constant 0 : i32
    return %arg0, %c0_i32 : i32, i32
  }
}

</mosaic_0001>

<llo_original>
// kernel: tpu_custom_call.1
$region0: #{tpu_custom_call.1}
  #allocation0 [shape = 'u32[]', space=smem, size = 0x4, offset = 0x4, fixed_abs, tag = 'smem constant byte address 0x4 - core index']
  #allocation1 [shape = 'u32[144,128]{1,0:T(1,128)}', space=vmem, size = 0x12000, scoped, tag = 'internal scratch']
  %s0 = inlined_call_operand.vmem [shape: bf16[8,32], index: 0, kind: input, shape index: {}]
  %s1 = inlined_call_operand.vmem [shape: bf16[32,20], index: 1, kind: input, shape index: {}]
  %s2 = inlined_call_operand.vmem [shape: f32[1,20], index: 2, kind: input, shape index: {}]
  %s3 = inlined_call_operand.vmem [shape: bf16[20,20], index: 3, kind: input, shape index: {}]
  %s4 = inlined_call_operand.vmem [shape: f32[1,20], index: 4, kind: input, shape index: {}]
  %s5 = inlined_call_operand.vmem [shape: bf16[20,6], index: 5, kind: input, shape index: {}]
  %s6 = inlined_call_operand.vmem [shape: f32[1,6], index: 6, kind: input, shape index: {}]
  %s7 = inlined_call_operand.hbm [shape: f32[8,6], index: 7, kind: output, shape index: {}]
  %s8 = sld [smem:[#allocation0]]
  $region38: #{tpu_custom_call.1} parent=0
    _
  %s10 = ssub.s32 1, %s8
  %s11 = scalar_select 0, %s10, %s8
  $region1: #{tpu_custom_call.1} parent=0
    #allocation2 [shape = 'u8[4096]{0}', space=vmem, size = 0x1000, scoped, tag = 'output window, operand 0, single buffered']
    #allocation3 [shape = 's32[1]{0}', space=sflag, size = 0x4, scoped, tag = 'scoped memory for tpu_custom_call.1']
    %12 = vsyncpa [#allocation3], 0
    // Predicated region
    $region2: #{tpu_custom_call.1} parent=1 // pred_check
      _
    $region3: #{tpu_custom_call.1} parent=1 // pred_check_branch
      %14 = sbr.rel (0) target = $region5
    $region4: #{tpu_custom_call.1} parent=1 // pred_region
      _
    $region5: #{tpu_custom_call.1} parent=1 // pred_fallthru
      _
    // Predicated region
    $region6: #{tpu_custom_call.1} parent=1 // pred_check
      _
    $region7: #{tpu_custom_call.1} parent=1 // pred_check_branch
      %16 = sbr.rel (0) target = $region9
    $region8: #{tpu_custom_call.1} parent=1 // pred_region
      _
    $region9: #{tpu_custom_call.1} parent=1 // pred_fallthru
      _
    // Predicated region
    $region10: #{tpu_custom_call.1} parent=1 // pred_check
      _
    $region11: #{tpu_custom_call.1} parent=1 // pred_check_branch
      %18 = sbr.rel (0) target = $region13
    $region12: #{tpu_custom_call.1} parent=1 // pred_region
      _
    $region13: #{tpu_custom_call.1} parent=1 // pred_fallthru
      _
    // Predicated region
    $region14: #{tpu_custom_call.1} parent=1 // pred_check
      _
    $region15: #{tpu_custom_call.1} parent=1 // pred_check_branch
      %20 = sbr.rel (0) target = $region17
    $region16: #{tpu_custom_call.1} parent=1 // pred_region
      _
    $region17: #{tpu_custom_call.1} parent=1 // pred_fallthru
      _
    // Predicated region
    $region18: #{tpu_custom_call.1} parent=1 // pred_check
      _
    $region19: #{tpu_custom_call.1} parent=1 // pred_check_branch
      %22 = sbr.rel (0) target = $region21
    $region20: #{tpu_custom_call.1} parent=1 // pred_region
      _
    $region21: #{tpu_custom_call.1} parent=1 // pred_fallthru
      _
    // Predicated region
    $region22: #{tpu_custom_call.1} parent=1 // pred_check
      _
    $region23: #{tpu_custom_call.1} parent=1 // pred_check_branch
      %24 = sbr.rel (0) target = $region25
    $region24: #{tpu_custom_call.1} parent=1 // pred_region
      _
    $region25: #{tpu_custom_call.1} parent=1 // pred_fallthru
      _
    // Predicated region
    $region26: #{tpu_custom_call.1} parent=1 // pred_check
      _
    $region27: #{tpu_custom_call.1} parent=1 // pred_check_branch
      %26 = sbr.rel (0) target = $region29
    $region28: #{tpu_custom_call.1} parent=1 // pred_region
      _
    $region29: #{tpu_custom_call.1} parent=1 // pred_fallthru
      _
    %v28 = vld [vmem:[%s0] sm:$0xf]
    %v29 = vld [vmem:[%s1] sm:$0xf]
    %v30 = vld [vmem:[%s1 + $0x4] sm:$0xf]
    %v31 = vld [vmem:[%s1 + $0x8] sm:$0xf]
    %v32 = vld [vmem:[%s1 + $0xc] sm:$0xf]
    %v33 = vld [vmem:[%s2] sm:$0x1]
    %v35 = vlaneseq
    %v36 = vshrl.u32 %v35, 7
    %v37 = vsub.s32 0, %v36
    %v38 = vrot.slane %v33, %v37
    %v44 = vunpack.c.l.b16 %v29
    %v45 = vunpack.c.l.b16 %v30
    %v46 = vunpack.c.l.b16 %v31
    %v47 = vunpack.c.l.b16 %v32
    %v48 = vpack.c.b16 %v45, %v44
    %v49 = vpack.c.b16 %v47, %v46
    %vm52 = vcmask 261120
    %v54 = vsel %vm52, %v28, 0
    %56 = vmatprep.subr.bf16.mxu0 0
    %57 = vmatpush1.bf16.msra.mxu0 %v48
    %58 = vmatprep.subr.bf16.mxu0 0
    %59 = vmatpush1.bf16.msra.mxu0 %v49
    %60 = vmatprep.subr.bf16.mxu0 0
    %61 = vmatpush1.bf16.msra.mxu0 0
    %62 = vmatprep.subr.bf16.mxu0 0
    %63 = vmatpush1.bf16.msra.mxu0 0
    %64 = vmatprep.subr.bf16.mxu0 0
    %65 = vmatpush1.bf16.msra.mxu0 0
    %66 = vmatprep.subr.bf16.mxu0 0
    %67 = vmatpush1.bf16.msra.mxu0 0
    %68 = vmatprep.subr.bf16.mxu0 0
    %69 = vmatpush1.bf16.msra.mxu0 0
    %70 = vmatprep.subr.bf16.mxu0 0
    %71 = vmatpush1.bf16.msra.mxu0 0
    %72 = vmatprep.subr.bf16.mxu0 0
    %73 = vmatpush1.bf16.msra.mxu0 0
    %74 = vmatprep.subr.bf16.mxu0 0
    %75 = vmatpush1.bf16.msra.mxu0 0
    %76 = vmatprep.subr.bf16.mxu0 0
    %77 = vmatpush1.bf16.msra.mxu0 0
    %78 = vmatprep.subr.bf16.mxu0 0
    %79 = vmatpush1.bf16.msra.mxu0 0
    %80 = vmatprep.subr.bf16.mxu0 0
    %81 = vmatpush1.bf16.msra.mxu0 0
    %82 = vmatprep.subr.bf16.mxu0 0
    %83 = vmatpush1.bf16.msra.mxu0 0
    %84 = vmatprep.subr.bf16.mxu0 0
    %85 = vmatpush1.bf16.msra.mxu0 0
    %86 = vmatprep.subr.bf16.mxu0 0
    %87 = vmatpush1.bf16.msra.mxu0 0
    %88 = vmatprep.mubr.bf16.mxu0 0
    %89 = vmatmul.mubr.bf16.gmra.mrb[0].mxu0 %v54
    %v90 = vpop.f32.mrb[0].mxu0
    %v91 = vadd.f32 %v38, %v90
    %v92 = vpop.f32.mrb[0].mxu0
    %v93 = vpop.f32.mrb[0].mxu0
    %v94 = vpop.f32.mrb[0].mxu0
    %95 = vdwg.mxu0
    %v96 = vtanh.pop %v91
    %v97 = vpack.c.bf16 %v96, %v96
    %v98 = vld [vmem:[%s3] sm:$0xf]
    %v99 = vld [vmem:[%s3 + $0x4] sm:$0xf]
    %v100 = vld [vmem:[%s3 + $0x8] sm:$0x3]
    %v101 = vld [vmem:[%s4] sm:$0x1]
    %v103 = vlaneseq
    %v104 = vshrl.u32 %v103, 7
    %v105 = vsub.s32 0, %v104
    %v106 = vrot.slane %v101, %v105
    %v111 = vunpack.c.l.b16 %v98
    %v112 = vunpack.c.l.b16 %v99
    %v113 = vunpack.c.l.b16 %v100
    %v114 = vpack.c.b16 %v112, %v111
    %v115 = vpack.c.b16 %v113, %v113
    %vm117 = vcmask 162816
    %v119 = vsel %vm117, %v97, 0
    %vm121 = vcmask 1041408
    %v123 = vsel %vm121, %v115, 0
    %125 = vmatprep.subr.bf16.mxu0 0
    %126 = vmatpush1.bf16.msra.mxu0 %v114
    %127 = vmatprep.subr.bf16.mxu0 0
    %128 = vmatpush1.bf16.msra.mxu0 %v123
    %129 = vmatprep.subr.bf16.mxu0 0
    %130 = vmatpush1.bf16.msra.mxu0 0
    %131 = vmatprep.subr.bf16.mxu0 0
    %132 = vmatpush1.bf16.msra.mxu0 0
    %133 = vmatprep.subr.bf16.mxu0 0
    %134 = vmatpush1.bf16.msra.mxu0 0
    %135 = vmatprep.subr.bf16.mxu0 0
    %136 = vmatpush1.bf16.msra.mxu0 0
    %137 = vmatprep.subr.bf16.mxu0 0
    %138 = vmatpush1.bf16.msra.mxu0 0
    %139 = vmatprep.subr.bf16.mxu0 0
    %140 = vmatpush1.bf16.msra.mxu0 0
    %141 = vmatprep.subr.bf16.mxu0 0
    %142 = vmatpush1.bf16.msra.mxu0 0
    %143 = vmatprep.subr.bf16.mxu0 0
    %144 = vmatpush1.bf16.msra.mxu0 0
    %145 = vmatprep.subr.bf16.mxu0 0
    %146 = vmatpush1.bf16.msra.mxu0 0
    %147 = vmatprep.subr.bf16.mxu0 0
    %148 = vmatpush1.bf16.msra.mxu0 0
    %149 = vmatprep.subr.bf16.mxu0 0
    %150 = vmatpush1.bf16.msra.mxu0 0
    %151 = vmatprep.subr.bf16.mxu0 0
    %152 = vmatpush1.bf16.msra.mxu0 0
    %153 = vmatprep.subr.bf16.mxu0 0
    %154 = vmatpush1.bf16.msra.mxu0 0
    %155 = vmatprep.subr.bf16.mxu0 0
    %156 = vmatpush1.bf16.msra.mxu0 0
    %157 = vmatprep.mubr.bf16.mxu0 0
    %158 = vmatmul.mubr.bf16.gmra.mrb[0].mxu0 %v119
    %v159 = vpop.f32.mrb[0].mxu0
    %v160 = vadd.f32 %v106, %v159
    %v161 = vpop.f32.mrb[0].mxu0
    %v162 = vpop.f32.mrb[0].mxu0
    %v163 = vpop.f32.mrb[0].mxu0
    %164 = vdwg.mxu0
    %v165 = vtanh.pop %v160
    %v166 = vpack.c.bf16 %v165, %v165
    %v167 = vld [vmem:[%s5] sm:$0xf]
    %v168 = vld [vmem:[%s5 + $0x4] sm:$0xf]
    %v169 = vld [vmem:[%s5 + $0x8] sm:$0x3]
    %v170 = vld [vmem:[%s6] sm:$0x1]
    %v172 = vlaneseq
    %v173 = vshrl.u32 %v172, 7
    %v174 = vsub.s32 0, %v173
    %v175 = vrot.slane %v170, %v174
    %v180 = vunpack.c.l.b16 %v167
    %v181 = vunpack.c.l.b16 %v168
    %v182 = vunpack.c.l.b16 %v169
    %v183 = vpack.c.b16 %v181, %v180
    %v184 = vpack.c.b16 %v182, %v182
    %v187 = vsel %vm117, %v166, 0
    %v190 = vsel %vm121, %v184, 0
    %192 = vmatprep.subr.bf16.mxu0 0
    %193 = vmatpush1.bf16.msra.mxu0 %v183
    %194 = vmatprep.subr.bf16.mxu0 0
    %195 = vmatpush1.bf16.msra.mxu0 %v190
    %196 = vmatprep.subr.bf16.mxu0 0
    %197 = vmatpush1.bf16.msra.mxu0 0
    %198 = vmatprep.subr.bf16.mxu0 0
    %199 = vmatpush1.bf16.msra.mxu0 0
    %200 = vmatprep.subr.bf16.mxu0 0
    %201 = vmatpush1.bf16.msra.mxu0 0
    %202 = vmatprep.subr.bf16.mxu0 0
    %203 = vmatpush1.bf16.msra.mxu0 0
    %204 = vmatprep.subr.bf16.mxu0 0
    %205 = vmatpush1.bf16.msra.mxu0 0
    %206 = vmatprep.subr.bf16.mxu0 0
    %207 = vmatpush1.bf16.msra.mxu0 0
    %208 = vmatprep.subr.bf16.mxu0 0
    %209 = vmatpush1.bf16.msra.mxu0 0
    %210 = vmatprep.subr.bf16.mxu0 0
    %211 = vmatpush1.bf16.msra.mxu0 0
    %212 = vmatprep.subr.bf16.mxu0 0
    %213 = vmatpush1.bf16.msra.mxu0 0
    %214 = vmatprep.subr.bf16.mxu0 0
    %215 = vmatpush1.bf16.msra.mxu0 0
    %216 = vmatprep.subr.bf16.mxu0 0
    %217 = vmatpush1.bf16.msra.mxu0 0
    %218 = vmatprep.subr.bf16.mxu0 0
    %219 = vmatpush1.bf16.msra.mxu0 0
    %220 = vmatprep.subr.bf16.mxu0 0
    %221 = vmatpush1.bf16.msra.mxu0 0
    %222 = vmatprep.subr.bf16.mxu0 0
    %223 = vmatpush1.bf16.msra.mxu0 0
    %224 = vmatprep.mubr.bf16.mxu0 0
    %225 = vmatmul.mubr.bf16.gmra.mrb[0].mxu0 %v187
    %v226 = vpop.f32.mrb[0].mxu0
    %v227 = vadd.f32 %v175, %v226
    %v228 = vpop.f32.mrb[0].mxu0
    %v229 = vpop.f32.mrb[0].mxu0
    %v230 = vpop.f32.mrb[0].mxu0
    %231 = vdwg.mxu0
    %vm232 = vcmask 48128
    %v233 = vsel %vm232, %v227, -inf
    %234 = vmax.xlane.f32.xlu0 %v233
    %v235 = vpop.xlane.xlu0 %234
    %v236 = vsub.f32 %v227, %v235
    %v237 = vmul.f32 %v236, 1.442695
    %v238 = vpow.pop %v237
    %v239 = vsel %vm232, %v238, 0.0
    %240 = vadd.xlane.f32.xlu0 %v239
    %v241 = vpop.xlane.xlu0 %240
    %v242 = vlog2.pop %v241
    %v243 = vmul.f32 %v242, 0.6931472
    %v244 = vsub.f32 %v236, %v243
    %245 = vst.msk [vmem:[#allocation2] sm:$0xff] %vm232, %v244
    // Predicated region
    $region30: #{tpu_custom_call.1} parent=1 // pred_check
      _
    $region31: #{tpu_custom_call.1} parent=1 // pred_check_branch
      %247 = sbr.rel (0) target = $region33
    $region32: #{tpu_custom_call.1} parent=1 // pred_region
      %s249 = ssub.s32 128, 128
      %250 = vsyncadd [#allocation3], %s249
      %s252 = sshll.u32 [#allocation2], 4
      %s253 = int_to_ptr.vmem [resolvable:$true] %s252
      %255 = dma.vmem_to_hbm [thread:$0]  %s253, 128, %s7, [#allocation3]
    $region33: #{tpu_custom_call.1} parent=1 // pred_fallthru
      _
    // Predicated region
    $region34: #{tpu_custom_call.1} parent=1 // pred_check
      _
    $region35: #{tpu_custom_call.1} parent=1 // pred_check_branch
      %257 = sbr.rel (0) target = $region37
    $region36: #{tpu_custom_call.1} parent=1 // pred_region
      %258 = dma.done [#allocation3], 128
    $region37: #{tpu_custom_call.1} parent=1 // pred_fallthru
      _
    %259 = vsyncpa [#allocation3], 1

</llo_original>
